<compile_context>
chip_gen: v7x
topology: tpu7x:2x2x1
jax: 0.10.0
libtpu: 0.0.40
codegen_flags: <defaults>
</compile_context>

<pallas_src>
import functools

import jax
import jax.numpy as jnp
from jax.experimental import pallas as pl
from jax.experimental.pallas import tpu as pltpu


def _round_up(n, m):
    return (n + m - 1) // m * m


def _dropout(h, keep_prob, seed_i32, salt, row_offset_i32):
    """Inverted dropout using a counter-based integer hash (portable, no TPU PRNG).

    h: (tm, C) float32 tile; mask depends only on (global row, col, salt, seed).
    """
    shape = h.shape
    rows = jax.lax.broadcasted_iota(jnp.int32, shape, 0) + row_offset_i32
    cols = jax.lax.broadcasted_iota(jnp.int32, shape, 1)
    z = rows * jnp.int32(shape[1]) + cols
    z = z + seed_i32 * jnp.int32(0x0343FD) + jnp.int32(salt)
    u = jax.lax.bitcast_convert_type(z, jnp.uint32)
    # murmur3 finalizer: pure integer VPU ops, good avalanche.
    u = u ^ (u >> jnp.uint32(16))
    u = u * jnp.uint32(0x85EBCA6B)
    u = u ^ (u >> jnp.uint32(13))
    u = u * jnp.uint32(0xC2B2AE35)
    u = u ^ (u >> jnp.uint32(16))
    threshold = jnp.uint32(min(int(keep_prob * 4294967296.0), 4294967295))
    keep = u < threshold                     # single unsigned compare, no float convert
    return jnp.where(keep, h * jnp.float32(1.0 / keep_prob), jnp.float32(0.0))


def prenet_kernel(seed_ref, x_ref, w1_ref, b1_ref, w2_ref, b2_ref, o_ref, h_ref,
                  *, dropout_p, training, mm_dtype):
    tm = x_ref.shape[0]
    apply_dropout = training and dropout_p > 0.0
    keep_prob = 1.0 - dropout_p

    seed = seed_ref[0]
    row_off = pl.program_id(0) * tm          # global row index of this tile

    # ---- Layer 1: Linear (MXU, f32 accumulate) + bias + ReLU (+ Dropout) ----
    h = jnp.dot(x_ref[...].astype(mm_dtype), w1_ref[...],
                preferred_element_type=jnp.float32)
    h = jnp.maximum(h + b1_ref[...], 0.0)
    if apply_dropout:
        h = _dropout(h, keep_prob, seed, 0x1234567, row_off)

    # Stage the (tm, H) intermediate through VMEM scratch (explicit, scheduled).
    h_ref[...] = h.astype(h_ref.dtype)

    # ---- Layer 2: Linear + bias + ReLU (+ Dropout) ----
    y = jnp.dot(h_ref[...], w2_ref[...], preferred_element_type=jnp.float32)
    y = jnp.maximum(y + b2_ref[...], 0.0)
    if apply_dropout:
        y = _dropout(y, keep_prob, seed, 0x7654321, row_off)

    o_ref[...] = y.astype(o_ref.dtype)


def prenet_forward(x, params, *, dropout_p=0.5, training=True, seed=0,
                   tm=256, matmul_dtype=jnp.bfloat16):
    """x: (B, T, input_size) float32.  Returns (B, T, output_size) float32.

    params = (w1, b1, w2, b2) with w1:(D,H), b1:(1,H), w2:(H,O), b2:(1,O)
    (i.e. weights transposed vs. PyTorch so the kernel computes x @ W + b).
    """
    w1, b1, w2, b2 = params
    B, T, D = x.shape
    assert w1.shape[0] == D
    H = w1.shape[1]
    O = w2.shape[1]

    # Lane-dense padding of the feature dims (multiples of 128).
    Hp = _round_up(H, 128)
    Op = _round_up(O, 128)
    if Hp != H:
        w1 = jnp.pad(w1, ((0, 0), (0, Hp - H)))
        b1 = jnp.pad(b1, ((0, 0), (0, Hp - H)))
        w2 = jnp.pad(w2, ((0, Hp - H), (0, 0)))
    if Op != O:
        w2 = jnp.pad(w2, ((0, 0), (0, Op - O)))
        b2 = jnp.pad(b2, ((0, 0), (0, Op - O)))

    # Weights feed the MXU in matmul_dtype; biases stay f32 for the VPU math.
    w1 = w1.astype(matmul_dtype)
    w2 = w2.astype(matmul_dtype)
    b1 = b1.astype(jnp.float32)
    b2 = b2.astype(jnp.float32)

    # Row tiling with ragged-edge handling via zero padding (no divisibility assert).
    M = B * T
    tm = _round_up(max(min(tm, _round_up(M, 8)), 8), 8)
    Mp = _round_up(M, tm)
    x2d = x.reshape(M, D).astype(jnp.float32)
    if Mp != M:
        x2d = jnp.pad(x2d, ((0, Mp - M), (0, 0)))

    seed_arr = jnp.asarray([seed], dtype=jnp.int32)

    # VMEM budget: double-buffered x/out tiles + (double-buffered) weights +
    # biases + staged intermediate; 2x headroom, clamped to the v7x 64 MiB budget.
    mm_bytes = jnp.dtype(matmul_dtype).itemsize
    vmem_est = (2 * tm * D * 4 + 2 * tm * Op * 4
                + 2 * (D * Hp + Hp * Op) * mm_bytes + 2 * (Hp + Op) * 4
                + tm * Hp * mm_bytes)
    vmem_limit = int(min(max(2 * vmem_est, 32 * 1024 * 1024), 64 * 1024 * 1024))

    kernel = functools.partial(
        prenet_kernel, dropout_p=float(dropout_p), training=bool(training),
        mm_dtype=matmul_dtype)

    out2d = pl.pallas_call(
        kernel,
        out_shape=jax.ShapeDtypeStruct((Mp, Op), jnp.float32),
        grid=(Mp // tm,),
        in_specs=[
            pl.BlockSpec(memory_space=pltpu.MemorySpace.SMEM),   # seed scalar
            pl.BlockSpec((tm, D), lambda i: (i, 0)),             # x row tile
            pl.BlockSpec((D, Hp), lambda i: (0, 0)),             # w1 (resident)
            pl.BlockSpec((1, Hp), lambda i: (0, 0)),             # b1
            pl.BlockSpec((Hp, Op), lambda i: (0, 0)),            # w2 (resident)
            pl.BlockSpec((1, Op), lambda i: (0, 0)),             # b2
        ],
        out_specs=pl.BlockSpec((tm, Op), lambda i: (i, 0)),
        scratch_shapes=[pltpu.VMEM((tm, Hp), matmul_dtype)],     # staged intermediate
        compiler_params=pltpu.CompilerParams(
            dimension_semantics=("parallel",),   # tiles independent -> megacore-friendly
            vmem_limit_bytes=vmem_limit,
        ),
    )(seed_arr, x2d, w1, b1, w2, b2)

    return out2d[:M, :O].reshape(B, T, O)


def init_prenet_params(key, input_size, hidden_size, output_size):
    """Deterministic init mimicking nn.Linear's U(-1/sqrt(fan_in), 1/sqrt(fan_in))."""
    k1, k2, k3, k4 = jax.random.split(key, 4)
    lim1 = 1.0 / jnp.sqrt(input_size)
    lim2 = 1.0 / jnp.sqrt(hidden_size)
    w1 = jax.random.uniform(k1, (input_size, hidden_size), jnp.float32, -lim1, lim1)
    b1 = jax.random.uniform(k2, (1, hidden_size), jnp.float32, -lim1, lim1)
    w2 = jax.random.uniform(k3, (hidden_size, output_size), jnp.float32, -lim2, lim2)
    b2 = jax.random.uniform(k4, (1, output_size), jnp.float32, -lim2, lim2)
    return w1, b1, w2, b2


if __name__ == "__main__":
    key = jax.random.PRNGKey(0)
    kx, kp = jax.random.split(key)

    B, T = 2, 8
    input_size, hidden_size, output_size = 32, 64, 32

    x = jax.random.normal(kx, (B, T, input_size), dtype=jnp.float32)
    params = init_prenet_params(kp, input_size, hidden_size, output_size)
    w1, b1, w2, b2 = params

    # Pure-JAX reference (eval mode: nn.Dropout is identity).
    ref = jnp.maximum(
        jnp.maximum(x.reshape(-1, input_size) @ w1 + b1, 0.0) @ w2 + b2, 0.0)

    # 1) Default path (bf16 MXU operands, dropout active, deterministic seed).
    y_train = prenet_forward(x, params, dropout_p=0.5, training=True, seed=1234)
    y_train = jax.block_until_ready(y_train)
    assert y_train.shape == (B, T, output_size)
    assert bool(jnp.all(jnp.isfinite(y_train)))
    assert bool(jnp.all(y_train >= 0.0))          # ReLU + inverted dropout => non-negative

    # 2) Exact-f32 path, eval mode: must match the pure-JAX reference tightly.
    y_eval_f32 = prenet_forward(x, params, dropout_p=0.5, training=False,
                                matmul_dtype=jnp.float32)
    y_eval_f32 = jax.block_until_ready(y_eval_f32)
    assert jnp.allclose(y_eval_f32.reshape(-1, output_size), ref,
                        atol=1e-4, rtol=1e-4)

    # 3) Default bf16 path, eval mode: loose check (bf16 operand rounding only).
    y_eval_bf16 = prenet_forward(x, params, dropout_p=0.5, training=False)
    y_eval_bf16 = jax.block_until_ready(y_eval_bf16)
    assert float(jnp.max(jnp.abs(y_eval_bf16.reshape(-1, output_size) - ref))) < 0.25

    print("KERNEL_OK")
</pallas_src>

<mosaic_0001>
module attributes {stable_mosaic.version = 11 : i64} {
  func.func @prenet_kernel(%arg0: i32, %arg1: memref<1xi32, #tpu.memory_space<smem>>, %arg2: memref<16x32xf32, #tpu.memory_space<vmem>>, %arg3: memref<32x128xbf16, #tpu.memory_space<vmem>>, %arg4: memref<1x128xf32, #tpu.memory_space<vmem>>, %arg5: memref<128x128xbf16, #tpu.memory_space<vmem>>, %arg6: memref<1x128xf32, #tpu.memory_space<vmem>>, %arg7: memref<16x128xf32, #tpu.memory_space<vmem>>, %arg8: memref<16x128xbf16, #tpu.memory_space<vmem>>) attributes {dimension_semantics = [#tpu.dimension_semantics<parallel>], iteration_bounds = array<i64: 1>, scalar_prefetch = 0 : i64, scratch_operands = 1 : i64, tpu.core_type = #tpu.core_type<tc>, window_params = [{transform_indices = @transform_0, window_bounds = array<i64: 1>}, {transform_indices = @transform_1, window_bounds = array<i64: 16, 32>}, {pipeline_mode = #tpu.pipeline_mode<synchronous>, transform_indices = @transform_2, window_bounds = array<i64: 32, 128>}, {pipeline_mode = #tpu.pipeline_mode<synchronous>, transform_indices = @transform_3, window_bounds = array<i64: 1, 128>}, {pipeline_mode = #tpu.pipeline_mode<synchronous>, transform_indices = @transform_4, window_bounds = array<i64: 128, 128>}, {pipeline_mode = #tpu.pipeline_mode<synchronous>, transform_indices = @transform_5, window_bounds = array<i64: 1, 128>}, {transform_indices = @transform_6, window_bounds = array<i64: 16, 128>}]} {
    %c0 = arith.constant 0 : index
    %0 = memref.load %arg1[%c0] : memref<1xi32, #tpu.memory_space<smem>>
    %c16_i32 = arith.constant 16 : i32
    %1 = arith.muli %arg0, %c16_i32 : i32
    %c0_0 = arith.constant 0 : index
    %c0_1 = arith.constant 0 : index
    %2 = vector.load %arg2[%c0_0, %c0_1] : memref<16x32xf32, #tpu.memory_space<vmem>>, vector<16x32xf32>
    %3 = arith.truncf %2 : vector<16x32xf32> to vector<16x32xbf16>
    %c0_2 = arith.constant 0 : index
    %c0_3 = arith.constant 0 : index
    %4 = vector.load %arg3[%c0_2, %c0_3] : memref<32x128xbf16, #tpu.memory_space<vmem>>, vector<32x128xbf16>
    %cst = arith.constant dense<0.000000e+00> : vector<16x128xf32>
    %5 = tpu.matmul %3, %4, %cst {dimension_numbers = #tpu.dot_dimension_numbers<[1], [0], [0], [1], [0, 0, 1, 1], [], []>} : vector<16x32xbf16>, vector<32x128xbf16>, vector<16x128xf32> -> vector<16x128xf32>
    %c0_4 = arith.constant 0 : index
    %c0_5 = arith.constant 0 : index
    %6 = vector.load %arg4[%c0_4, %c0_5] : memref<1x128xf32, #tpu.memory_space<vmem>>, vector<1x128xf32>
    %7 = vector.broadcast %6 : vector<1x128xf32> to vector<16x128xf32>
    %8 = arith.addf %5, %7 : vector<16x128xf32>
    %cst_6 = arith.constant 0.000000e+00 : f32
    %9 = vector.broadcast %cst_6 : f32 to vector<16x128xf32>
    %10 = arith.maximumf %8, %9 : vector<16x128xf32>
    %11 = tpu.iota {dimensions = array<i32: 0>} : vector<16x128xi32>
    %12 = vector.broadcast %1 : i32 to vector<16x128xi32>
    %13 = arith.addi %11, %12 : vector<16x128xi32>
    %14 = tpu.iota {dimensions = array<i32: 1>} : vector<16x128xi32>
    %c128_i32 = arith.constant 128 : i32
    %15 = vector.broadcast %c128_i32 : i32 to vector<16x128xi32>
    %16 = arith.muli %13, %15 : vector<16x128xi32>
    %17 = arith.addi %16, %14 : vector<16x128xi32>
    %c214013_i32 = arith.constant 214013 : i32
    %18 = arith.muli %0, %c214013_i32 : i32
    %19 = vector.broadcast %18 : i32 to vector<16x128xi32>
    %20 = arith.addi %17, %19 : vector<16x128xi32>
    %c19088743_i32 = arith.constant 19088743 : i32
    %21 = vector.broadcast %c19088743_i32 : i32 to vector<16x128xi32>
    %22 = arith.addi %20, %21 : vector<16x128xi32>
    %23 = tpu.bitcast %22 : vector<16x128xi32> -> vector<16x128xi32>
    %c16_i32_7 = arith.constant 16 : i32
    %24 = vector.broadcast %c16_i32_7 : i32 to vector<16x128xi32>
    %25 = arith.shrui %23, %24 : vector<16x128xi32>
    %26 = arith.xori %23, %25 : vector<16x128xi32>
    %c-2048144789_i32 = arith.constant -2048144789 : i32
    %27 = vector.broadcast %c-2048144789_i32 : i32 to vector<16x128xi32>
    %28 = arith.muli %26, %27 : vector<16x128xi32>
    %c13_i32 = arith.constant 13 : i32
    %29 = vector.broadcast %c13_i32 : i32 to vector<16x128xi32>
    %30 = arith.shrui %28, %29 : vector<16x128xi32>
    %31 = arith.xori %28, %30 : vector<16x128xi32>
    %c-1028477387_i32 = arith.constant -1028477387 : i32
    %32 = vector.broadcast %c-1028477387_i32 : i32 to vector<16x128xi32>
    %33 = arith.muli %31, %32 : vector<16x128xi32>
    %c16_i32_8 = arith.constant 16 : i32
    %34 = vector.broadcast %c16_i32_8 : i32 to vector<16x128xi32>
    %35 = arith.shrui %33, %34 : vector<16x128xi32>
    %36 = arith.xori %33, %35 : vector<16x128xi32>
    %c-2147483648_i32 = arith.constant -2147483648 : i32
    %37 = vector.broadcast %c-2147483648_i32 : i32 to vector<16x128xi32>
    %38 = arith.cmpi ult, %36, %37 : vector<16x128xi32>
    %cst_9 = arith.constant 2.000000e+00 : f32
    %39 = vector.broadcast %cst_9 : f32 to vector<16x128xf32>
    %40 = arith.mulf %10, %39 : vector<16x128xf32>
    %cst_10 = arith.constant 0.000000e+00 : f32
    %41 = vector.broadcast %cst_10 : f32 to vector<16x128xf32>
    %42 = arith.select %38, %40, %41 : vector<16x128xi1>, vector<16x128xf32>
    %43 = arith.truncf %42 : vector<16x128xf32> to vector<16x128xbf16>
    %c0_11 = arith.constant 0 : index
    %c0_12 = arith.constant 0 : index
    %44 = vector.load %arg8[%c0_11, %c0_12] : memref<16x128xbf16, #tpu.memory_space<vmem>>, vector<16x128xbf16>
    tpu.vector_store %arg8[%c0_11, %c0_12], %43 {strides = array<i32>} : memref<16x128xbf16, #tpu.memory_space<vmem>>, vector<16x128xbf16>,
    %c0_13 = arith.constant 0 : index
    %c0_14 = arith.constant 0 : index
    %45 = vector.load %arg8[%c0_13, %c0_14] : memref<16x128xbf16, #tpu.memory_space<vmem>>, vector<16x128xbf16>
    %c0_15 = arith.constant 0 : index
    %c0_16 = arith.constant 0 : index
    %46 = vector.load %arg5[%c0_15, %c0_16] : memref<128x128xbf16, #tpu.memory_space<vmem>>, vector<128x128xbf16>
    %cst_17 = arith.constant dense<0.000000e+00> : vector<16x128xf32>
    %47 = tpu.matmul %45, %46, %cst_17 {dimension_numbers = #tpu.dot_dimension_numbers<[1], [0], [0], [1], [0, 0, 1, 1], [], []>} : vector<16x128xbf16>, vector<128x128xbf16>, vector<16x128xf32> -> vector<16x128xf32>
    %c0_18 = arith.constant 0 : index
    %c0_19 = arith.constant 0 : index
    %48 = vector.load %arg6[%c0_18, %c0_19] : memref<1x128xf32, #tpu.memory_space<vmem>>, vector<1x128xf32>
    %49 = vector.broadcast %48 : vector<1x128xf32> to vector<16x128xf32>
    %50 = arith.addf %47, %49 : vector<16x128xf32>
    %cst_20 = arith.constant 0.000000e+00 : f32
    %51 = vector.broadcast %cst_20 : f32 to vector<16x128xf32>
    %52 = arith.maximumf %50, %51 : vector<16x128xf32>
    %53 = tpu.iota {dimensions = array<i32: 0>} : vector<16x128xi32>
    %54 = vector.broadcast %1 : i32 to vector<16x128xi32>
    %55 = arith.addi %53, %54 : vector<16x128xi32>
    %56 = tpu.iota {dimensions = array<i32: 1>} : vector<16x128xi32>
    %c128_i32_21 = arith.constant 128 : i32
    %57 = vector.broadcast %c128_i32_21 : i32 to vector<16x128xi32>
    %58 = arith.muli %55, %57 : vector<16x128xi32>
    %59 = arith.addi %58, %56 : vector<16x128xi32>
    %c214013_i32_22 = arith.constant 214013 : i32
    %60 = arith.muli %0, %c214013_i32_22 : i32
    %61 = vector.broadcast %60 : i32 to vector<16x128xi32>
    %62 = arith.addi %59, %61 : vector<16x128xi32>
    %c124076833_i32 = arith.constant 124076833 : i32
    %63 = vector.broadcast %c124076833_i32 : i32 to vector<16x128xi32>
    %64 = arith.addi %62, %63 : vector<16x128xi32>
    %65 = tpu.bitcast %64 : vector<16x128xi32> -> vector<16x128xi32>
    %c16_i32_23 = arith.constant 16 : i32
    %66 = vector.broadcast %c16_i32_23 : i32 to vector<16x128xi32>
    %67 = arith.shrui %65, %66 : vector<16x128xi32>
    %68 = arith.xori %65, %67 : vector<16x128xi32>
    %c-2048144789_i32_24 = arith.constant -2048144789 : i32
    %69 = vector.broadcast %c-2048144789_i32_24 : i32 to vector<16x128xi32>
    %70 = arith.muli %68, %69 : vector<16x128xi32>
    %c13_i32_25 = arith.constant 13 : i32
    %71 = vector.broadcast %c13_i32_25 : i32 to vector<16x128xi32>
    %72 = arith.shrui %70, %71 : vector<16x128xi32>
    %73 = arith.xori %70, %72 : vector<16x128xi32>
    %c-1028477387_i32_26 = arith.constant -1028477387 : i32
    %74 = vector.broadcast %c-1028477387_i32_26 : i32 to vector<16x128xi32>
    %75 = arith.muli %73, %74 : vector<16x128xi32>
    %c16_i32_27 = arith.constant 16 : i32
    %76 = vector.broadcast %c16_i32_27 : i32 to vector<16x128xi32>
    %77 = arith.shrui %75, %76 : vector<16x128xi32>
    %78 = arith.xori %75, %77 : vector<16x128xi32>
    %c-2147483648_i32_28 = arith.constant -2147483648 : i32
    %79 = vector.broadcast %c-2147483648_i32_28 : i32 to vector<16x128xi32>
    %80 = arith.cmpi ult, %78, %79 : vector<16x128xi32>
    %cst_29 = arith.constant 2.000000e+00 : f32
    %81 = vector.broadcast %cst_29 : f32 to vector<16x128xf32>
    %82 = arith.mulf %52, %81 : vector<16x128xf32>
    %cst_30 = arith.constant 0.000000e+00 : f32
    %83 = vector.broadcast %cst_30 : f32 to vector<16x128xf32>
    %84 = arith.select %80, %82, %83 : vector<16x128xi1>, vector<16x128xf32>
    %c0_31 = arith.constant 0 : index
    %c0_32 = arith.constant 0 : index
    %85 = vector.load %arg7[%c0_31, %c0_32] : memref<16x128xf32, #tpu.memory_space<vmem>>, vector<16x128xf32>
    tpu.vector_store %arg7[%c0_31, %c0_32], %84 {strides = array<i32>} : memref<16x128xf32, #tpu.memory_space<vmem>>, vector<16x128xf32>,
    return
  }
  func.func @transform_0(%arg0: i32) -> i32 {
    %c0_i32 = arith.constant 0 : i32
    %c0_i32_0 = arith.constant 0 : i32
    return %c0_i32 : i32
  }
  func.func @transform_1(%arg0: i32) -> (i32, i32) {
    %c0_i32 = arith.constant 0 : i32
    %c0_i32_0 = arith.constant 0 : i32
    return %arg0, %c0_i32 : i32, i32
  }
  func.func @transform_2(%arg0: i32) -> (i32, i32) {
    %c0_i32 = arith.constant 0 : i32
    %c0_i32_0 = arith.constant 0 : i32
    %c0_i32_1 = arith.constant 0 : i32
    return %c0_i32, %c0_i32_0 : i32, i32
  }
  func.func @transform_3(%arg0: i32) -> (i32, i32) {
    %c0_i32 = arith.constant 0 : i32
    %c0_i32_0 = arith.constant 0 : i32
    %c0_i32_1 = arith.constant 0 : i32
    return %c0_i32, %c0_i32_0 : i32, i32
  }
  func.func @transform_4(%arg0: i32) -> (i32, i32) {
    %c0_i32 = arith.constant 0 : i32
    %c0_i32_0 = arith.constant 0 : i32
    %c0_i32_1 = arith.constant 0 : i32
    return %c0_i32, %c0_i32_0 : i32, i32
  }
  func.func @transform_5(%arg0: i32) -> (i32, i32) {
    %c0_i32 = arith.constant 0 : i32
    %c0_i32_0 = arith.constant 0 : i32
    %c0_i32_1 = arith.constant 0 : i32
    return %c0_i32, %c0_i32_0 : i32, i32
  }
  func.func @transform_6(%arg0: i32) -> (i32, i32) {
    %c0_i32 = arith.constant 0 : i32
    %c0_i32_0 = arith.constant 0 : i32
    return %arg0, %c0_i32 : i32, i32
  }
}

</mosaic_0001>

<llo_original>
// kernel: tpu_custom_call.1
$region0: #{tpu_custom_call.1}
  #allocation0 [shape = 'u32[]', space=smem, size = 0x4, offset = 0x4, fixed_abs, tag = 'smem constant byte address 0x4 - core index']
  #allocation1 [shape = 'u32[144,128]{1,0:T(1,128)}', space=vmem, size = 0x12000, scoped, tag = 'internal scratch']
  #allocation2 [shape = 'bf16[16,128]{1,0:T(16,128)(2,1)}', space=vmem, size = 0x1000, scoped, tag = 'scratch operand']
  #allocation3 [shape = 's32[1]{0:T(128)S(6)}', space=smem, size = 0x200, scoped, tag = 'scoped memory for tpu_custom_call.1']
  %s0 = inlined_call_operand.<no memory space> [shape: s32[1], index: 0, kind: input, shape index: {}]
  %s1 = inlined_call_operand.hbm [shape: f32[16,32], index: 1, kind: input, shape index: {}]
  %s2 = inlined_call_operand.hbm [shape: bf16[32,128], index: 2, kind: input, shape index: {}]
  %s3 = inlined_call_operand.vmem [shape: f32[1,128], index: 3, kind: input, shape index: {}]
  %s4 = inlined_call_operand.hbm [shape: bf16[128,128], index: 4, kind: input, shape index: {}]
  %s5 = inlined_call_operand.vmem [shape: f32[1,128], index: 5, kind: input, shape index: {}]
  %s6 = inlined_call_operand.hbm [shape: f32[16,128], index: 6, kind: output, shape index: {}]
  %s7 = sld [smem:[#allocation0]]
  $region46: #{tpu_custom_call.1} parent=0
    _
  %s9 = ssub.s32 1, %s7
  %s10 = scalar_select 0, %s9, %s7
  %11 = sst [smem:[#allocation3]] %s0
  $region1: #{tpu_custom_call.1} parent=0
    #allocation4 [shape = 'u8[8192]{0}', space=vmem, size = 0x2000, scoped, tag = 'input window, operand 1, single buffered']
    #allocation5 [shape = 's32[1]{0}', space=sflag, size = 0x4, scoped, tag = 'scoped memory for tpu_custom_call.1']
    #allocation6 [shape = 's32[1]{0}', space=sflag, size = 0x4, scoped, tag = 'scoped memory for tpu_custom_call.1']
    #allocation7 [shape = 'u8[8192]{0}', space=vmem, size = 0x2000, scoped, tag = 'input window, operand 2, single buffered']
    #allocation8 [shape = 's32[1]{0}', space=sflag, size = 0x4, scoped, tag = 'scoped memory for tpu_custom_call.1']
    #allocation9 [shape = 'u8[32768]{0}', space=vmem, size = 0x8000, scoped, tag = 'input window, operand 4, single buffered']
    #allocation10 [shape = 'u8[8192]{0}', space=vmem, size = 0x2000, scoped, tag = 'output window, operand 0, single buffered']
    %12 = vsyncpa [#allocation5], 0
    %13 = vsyncpa [#allocation8], 0
    %14 = vsyncpa [#allocation6], 0
    // Predicated region
    $region2: #{tpu_custom_call.1} parent=1 // pred_check
      _
    $region3: #{tpu_custom_call.1} parent=1 // pred_check_branch
      %16 = sbr.rel (0) target = $region5
    $region4: #{tpu_custom_call.1} parent=1 // pred_region
      _
    $region5: #{tpu_custom_call.1} parent=1 // pred_fallthru
      _
    // Predicated region
    $region6: #{tpu_custom_call.1} parent=1 // pred_check
      _
    $region7: #{tpu_custom_call.1} parent=1 // pred_check_branch
      %18 = sbr.rel (0) target = $region9
    $region8: #{tpu_custom_call.1} parent=1 // pred_region
      %s20 = ssub.s32 256, 256
      %21 = vsyncadd [#allocation5], %s20
      %s22 = sshll.u32 [#allocation4], 4
      %s23 = int_to_ptr.vmem [resolvable:$true] %s22
      %28 = dma.hbm_to_vmem [thread:$0]  %s1, 256, %s23, [#allocation5], 128, 128, 8
    $region9: #{tpu_custom_call.1} parent=1 // pred_fallthru
      _
    // Predicated region
    $region10: #{tpu_custom_call.1} parent=1 // pred_check
      _
    $region11: #{tpu_custom_call.1} parent=1 // pred_check_branch
      %30 = sbr.rel (0) target = $region13
    $region12: #{tpu_custom_call.1} parent=1 // pred_region
      %s32 = ssub.s32 256, 256
      %33 = vsyncadd [#allocation8], %s32
      %s34 = sshll.u32 [#allocation7], 4
      %s35 = int_to_ptr.vmem [resolvable:$true] %s34
      %40 = dma.hbm_to_vmem [thread:$0]  %s2, 256, %s35, [#allocation8], 64, 64, 4
    $region13: #{tpu_custom_call.1} parent=1 // pred_fallthru
      _
    // Predicated region
    $region14: #{tpu_custom_call.1} parent=1 // pred_check
      _
    $region15: #{tpu_custom_call.1} parent=1 // pred_check_branch
      %42 = sbr.rel (0) target = $region17
    $region16: #{tpu_custom_call.1} parent=1 // pred_region
      _
    $region17: #{tpu_custom_call.1} parent=1 // pred_fallthru
      _
    // Predicated region
    $region18: #{tpu_custom_call.1} parent=1 // pred_check
      _
    $region19: #{tpu_custom_call.1} parent=1 // pred_check_branch
      %44 = sbr.rel (0) target = $region21
    $region20: #{tpu_custom_call.1} parent=1 // pred_region
      %s46 = ssub.s32 1024, 1024
      %47 = vsyncadd [#allocation8], %s46
      %s48 = sshll.u32 [#allocation9], 4
      %s49 = int_to_ptr.vmem [resolvable:$true] %s48
      %54 = dma.hbm_to_vmem [thread:$0]  %s4, 1024, %s49, [#allocation8], 64, 64, 4
    $region21: #{tpu_custom_call.1} parent=1 // pred_fallthru
      _
    // Predicated region
    $region22: #{tpu_custom_call.1} parent=1 // pred_check
      _
    $region23: #{tpu_custom_call.1} parent=1 // pred_check_branch
      %56 = sbr.rel (0) target = $region25
    $region24: #{tpu_custom_call.1} parent=1 // pred_region
      _
    $region25: #{tpu_custom_call.1} parent=1 // pred_fallthru
      _
    // Predicated region
    $region26: #{tpu_custom_call.1} parent=1 // pred_check
      _
    $region27: #{tpu_custom_call.1} parent=1 // pred_check_branch
      %58 = sbr.rel (0) target = $region29
    $region28: #{tpu_custom_call.1} parent=1 // pred_region
      %59 = dma.done [#allocation5], 256
    $region29: #{tpu_custom_call.1} parent=1 // pred_fallthru
      _
    // Predicated region
    $region30: #{tpu_custom_call.1} parent=1 // pred_check
      _
    $region31: #{tpu_custom_call.1} parent=1 // pred_check_branch
      %61 = sbr.rel (0) target = $region33
    $region32: #{tpu_custom_call.1} parent=1 // pred_region
      %62 = dma.done [#allocation8], 256
    $region33: #{tpu_custom_call.1} parent=1 // pred_fallthru
      _
    // Predicated region
    $region34: #{tpu_custom_call.1} parent=1 // pred_check
      _
    $region35: #{tpu_custom_call.1} parent=1 // pred_check_branch
      %64 = sbr.rel (0) target = $region37
    $region36: #{tpu_custom_call.1} parent=1 // pred_region
      %65 = dma.done [#allocation8], 1024
    $region37: #{tpu_custom_call.1} parent=1 // pred_fallthru
      _
    %s67 = sld [smem:[#allocation3]]
    %s68 = smul.u32 0, 16
    %v69 = vld [vmem:[#allocation4] sm:$0xff]
    %v70 = vld [vmem:[#allocation4 + $0x8] sm:$0xff]
    %v71 = vpack.c.bf16 %v70, %v69
    %v72 = vld [vmem:[#allocation7] sm:$0xf]
    %v73 = vld [vmem:[#allocation7 + $0x4] sm:$0xf]
    %v74 = vld [vmem:[#allocation7 + $0x8] sm:$0xf]
    %v75 = vld [vmem:[#allocation7 + $0xc] sm:$0xf]
    %v76 = vld [vmem:[%s3] sm:$0x1]
    %v78 = vlaneseq
    %v79 = vshrl.u32 %v78, 7
    %v80 = vsub.s32 0, %v79
    %v81 = vrot.slane %v76, %v80
    %v87 = vunpack.c.l.b16 %v72
    %v88 = vunpack.c.l.b16 %v73
    %v89 = vunpack.c.l.b16 %v74
    %v90 = vunpack.c.l.b16 %v75
    %v91 = vpack.c.b16 %v88, %v87
    %v92 = vpack.c.b16 %v90, %v89
    %vm95 = vcmask 261120
    %v97 = vsel %vm95, %v71, 0
    %99 = vmatprep.subr.bf16.mxu0 0
    %100 = vmatpush1.bf16.msra.mxu0 %v91
    %101 = vmatprep.subr.bf16.mxu0 0
    %102 = vmatpush1.bf16.msra.mxu0 %v92
    %103 = vmatprep.subr.bf16.mxu0 0
    %104 = vmatpush1.bf16.msra.mxu0 0
    %105 = vmatprep.subr.bf16.mxu0 0
    %106 = vmatpush1.bf16.msra.mxu0 0
    %107 = vmatprep.subr.bf16.mxu0 0
    %108 = vmatpush1.bf16.msra.mxu0 0
    %109 = vmatprep.subr.bf16.mxu0 0
    %110 = vmatpush1.bf16.msra.mxu0 0
    %111 = vmatprep.subr.bf16.mxu0 0
    %112 = vmatpush1.bf16.msra.mxu0 0
    %113 = vmatprep.subr.bf16.mxu0 0
    %114 = vmatpush1.bf16.msra.mxu0 0
    %115 = vmatprep.subr.bf16.mxu0 0
    %116 = vmatpush1.bf16.msra.mxu0 0
    %117 = vmatprep.subr.bf16.mxu0 0
    %118 = vmatpush1.bf16.msra.mxu0 0
    %119 = vmatprep.subr.bf16.mxu0 0
    %120 = vmatpush1.bf16.msra.mxu0 0
    %121 = vmatprep.subr.bf16.mxu0 0
    %122 = vmatpush1.bf16.msra.mxu0 0
    %123 = vmatprep.subr.bf16.mxu0 0
    %124 = vmatpush1.bf16.msra.mxu0 0
    %125 = vmatprep.subr.bf16.mxu0 0
    %126 = vmatpush1.bf16.msra.mxu0 0
    %127 = vmatprep.subr.bf16.mxu0 0
    %128 = vmatpush1.bf16.msra.mxu0 0
    %129 = vmatprep.subr.bf16.mxu0 0
    %130 = vmatpush1.bf16.msra.mxu0 0
    %131 = vmatprep.mubr.bf16.mxu0 0
    %132 = vmatmul.mubr.bf16.gmra.mrb[0].mxu0 %v97
    %v133 = vpop.f32.mrb[0].mxu0
    %v134 = vadd.f32 %v81, %v133
    %v135 = vpop.f32.mrb[0].mxu0
    %v136 = vpop.f32.mrb[0].mxu0
    %v137 = vadd.f32 %v81, %v136
    %v138 = vpop.f32.mrb[0].mxu0
    %139 = vdwg.mxu0
    %v140 = vmax.f32 %v134, 0.0
    %v141 = vmax.f32 %v137, 0.0
    %v142 = vlaneseq
    %v143 = vshrl.u32 %v142, 7
    %v144 = vadd.s32 %v143, 8
    %v145 = vstv %s68
    %v146 = vadd.s32 %v143, %v145
    %v147 = vadd.s32 %v144, %v145
    %v148 = vlaneseq
    %v149 = vand.u32 %v148, 127
    %v150 = vmul.u32 %v146, 128
    %v151 = vmul.u32 %v147, 128
    %v152 = vadd.s32 %v150, %v149
    %v153 = vadd.s32 %v151, %v149
    %s154 = smul.u32 %s67, 214013
    %v155 = vstv %s154
    %v156 = vadd.s32 %v152, %v155
    %v157 = vadd.s32 %v153, %v155
    %v158 = vadd.s32 %v156, 19088743
    %v159 = vadd.s32 %v157, 19088743
    %v160 = vshrl.u32 %v158, 16
    %v161 = vshrl.u32 %v159, 16
    %v162 = vxor.u32 %v158, %v160
    %v163 = vxor.u32 %v159, %v161
    %v164 = vmul.u32 %v162, 2246822507
    %v165 = vmul.u32 %v163, 2246822507
    %v166 = vshrl.u32 %v164, 13
    %v167 = vshrl.u32 %v165, 13
    %v168 = vxor.u32 %v164, %v166
    %v169 = vxor.u32 %v165, %v167
    %v170 = vmul.u32 %v168, 3266489909
    %v171 = vmul.u32 %v169, 3266489909
    %v172 = vshrl.u32 %v170, 16
    %v173 = vshrl.u32 %v171, 16
    %v174 = vxor.u32 %v170, %v172
    %v175 = vxor.u32 %v171, %v173
    %vm176 = vcmp.lt.u32.totalorder %v174, 2147483648
    %vm177 = vcmp.lt.u32.totalorder %v175, 2147483648
    %v178 = vmul.f32 %v140, 2.0
    %v179 = vmul.f32 %v141, 2.0
    %v180 = vsel %vm176, %v178, 0.0
    %v181 = vsel %vm177, %v179, 0.0
    %v182 = vpack.c.bf16 %v181, %v180
    %183 = vst [vmem:[#allocation2] sm:$0xff] %v182
    %v184 = vld [vmem:[#allocation2] sm:$0xff]
    %v185 = vld [vmem:[#allocation9] sm:$0xf]
    %v186 = vld [vmem:[#allocation9 + $0x4] sm:$0xf]
    %v187 = vld [vmem:[#allocation9 + $0x8] sm:$0xf]
    %v188 = vld [vmem:[#allocation9 + $0xc] sm:$0xf]
    %v189 = vld [vmem:[#allocation9 + $0x10] sm:$0xf]
    %v190 = vld [vmem:[#allocation9 + $0x14] sm:$0xf]
    %v191 = vld [vmem:[#allocation9 + $0x18] sm:$0xf]
    %v192 = vld [vmem:[#allocation9 + $0x1c] sm:$0xf]
    %v193 = vld [vmem:[#allocation9 + $0x20] sm:$0xf]
    %v194 = vld [vmem:[#allocation9 + $0x24] sm:$0xf]
    %v195 = vld [vmem:[#allocation9 + $0x28] sm:$0xf]
    %v196 = vld [vmem:[#allocation9 + $0x2c] sm:$0xf]
    %v197 = vld [vmem:[#allocation9 + $0x30] sm:$0xf]
    %v198 = vld [vmem:[#allocation9 + $0x34] sm:$0xf]
    %v199 = vld [vmem:[#allocation9 + $0x38] sm:$0xf]
    %v200 = vld [vmem:[#allocation9 + $0x3c] sm:$0xf]
    %v201 = vld [vmem:[%s5] sm:$0x1]
    %v203 = vlaneseq
    %v204 = vshrl.u32 %v203, 7
    %v205 = vsub.s32 0, %v204
    %v206 = vrot.slane %v201, %v205
    %v224 = vunpack.c.l.b16 %v185
    %v225 = vunpack.c.l.b16 %v186
    %v226 = vunpack.c.l.b16 %v187
    %v227 = vunpack.c.l.b16 %v188
    %v228 = vunpack.c.l.b16 %v189
    %v229 = vunpack.c.l.b16 %v190
    %v230 = vunpack.c.l.b16 %v191
    %v231 = vunpack.c.l.b16 %v192
    %v232 = vunpack.c.l.b16 %v193
    %v233 = vunpack.c.l.b16 %v194
    %v234 = vunpack.c.l.b16 %v195
    %v235 = vunpack.c.l.b16 %v196
    %v236 = vunpack.c.l.b16 %v197
    %v237 = vunpack.c.l.b16 %v198
    %v238 = vunpack.c.l.b16 %v199
    %v239 = vunpack.c.l.b16 %v200
    %v240 = vpack.c.b16 %v225, %v224
    %v241 = vpack.c.b16 %v227, %v226
    %v242 = vpack.c.b16 %v229, %v228
    %v243 = vpack.c.b16 %v231, %v230
    %v244 = vpack.c.b16 %v233, %v232
    %v245 = vpack.c.b16 %v235, %v234
    %v246 = vpack.c.b16 %v237, %v236
    %v247 = vpack.c.b16 %v239, %v238
    %256 = vmatprep.subr.bf16.mxu0 0
    %257 = vmatpush1.bf16.msra.mxu0 %v240
    %258 = vmatprep.subr.bf16.mxu0 0
    %259 = vmatpush1.bf16.msra.mxu0 %v241
    %260 = vmatprep.subr.bf16.mxu0 0
    %261 = vmatpush1.bf16.msra.mxu0 %v242
    %262 = vmatprep.subr.bf16.mxu0 0
    %263 = vmatpush1.bf16.msra.mxu0 %v243
    %264 = vmatprep.subr.bf16.mxu0 0
    %265 = vmatpush1.bf16.msra.mxu0 %v244
    %266 = vmatprep.subr.bf16.mxu0 0
    %267 = vmatpush1.bf16.msra.mxu0 %v245
    %268 = vmatprep.subr.bf16.mxu0 0
    %269 = vmatpush1.bf16.msra.mxu0 %v246
    %270 = vmatprep.subr.bf16.mxu0 0
    %271 = vmatpush1.bf16.msra.mxu0 %v247
    %272 = vmatprep.subr.bf16.mxu0 0
    %273 = vmatpush1.bf16.msra.mxu0 0
    %274 = vmatprep.subr.bf16.mxu0 0
    %275 = vmatpush1.bf16.msra.mxu0 0
    %276 = vmatprep.subr.bf16.mxu0 0
    %277 = vmatpush1.bf16.msra.mxu0 0
    %278 = vmatprep.subr.bf16.mxu0 0
    %279 = vmatpush1.bf16.msra.mxu0 0
    %280 = vmatprep.subr.bf16.mxu0 0
    %281 = vmatpush1.bf16.msra.mxu0 0
    %282 = vmatprep.subr.bf16.mxu0 0
    %283 = vmatpush1.bf16.msra.mxu0 0
    %284 = vmatprep.subr.bf16.mxu0 0
    %285 = vmatpush1.bf16.msra.mxu0 0
    %286 = vmatprep.subr.bf16.mxu0 0
    %287 = vmatpush1.bf16.msra.mxu0 0
    %288 = vmatprep.mubr.bf16.mxu0 0
    %289 = vmatmul.mubr.bf16.gmra.mrb[0].mxu0 %v184
    %v290 = vpop.f32.mrb[0].mxu0
    %v291 = vadd.f32 %v206, %v290
    %v292 = vpop.f32.mrb[0].mxu0
    %v293 = vpop.f32.mrb[0].mxu0
    %v294 = vadd.f32 %v206, %v293
    %v295 = vpop.f32.mrb[0].mxu0
    %296 = vdwg.mxu0
    %v297 = vmax.f32 %v291, 0.0
    %v298 = vmax.f32 %v294, 0.0
    %v299 = vadd.s32 %v156, 124076833
    %v300 = vadd.s32 %v157, 124076833
    %v301 = vshrl.u32 %v299, 16
    %v302 = vshrl.u32 %v300, 16
    %v303 = vxor.u32 %v299, %v301
    %v304 = vxor.u32 %v300, %v302
    %v305 = vmul.u32 %v303, 2246822507
    %v306 = vmul.u32 %v304, 2246822507
    %v307 = vshrl.u32 %v305, 13
    %v308 = vshrl.u32 %v306, 13
    %v309 = vxor.u32 %v305, %v307
    %v310 = vxor.u32 %v306, %v308
    %v311 = vmul.u32 %v309, 3266489909
    %v312 = vmul.u32 %v310, 3266489909
    %v313 = vshrl.u32 %v311, 16
    %v314 = vshrl.u32 %v312, 16
    %v315 = vxor.u32 %v311, %v313
    %v316 = vxor.u32 %v312, %v314
    %vm317 = vcmp.lt.u32.totalorder %v315, 2147483648
    %vm318 = vcmp.lt.u32.totalorder %v316, 2147483648
    %v319 = vmul.f32 %v297, 2.0
    %v320 = vmul.f32 %v298, 2.0
    %v321 = vsel %vm317, %v319, 0.0
    %v322 = vsel %vm318, %v320, 0.0
    %323 = vst [vmem:[#allocation10] sm:$0xff] %v321
    %324 = vst [vmem:[#allocation10 + $0x8] sm:$0xff] %v322
    // Predicated region
    $region38: #{tpu_custom_call.1} parent=1 // pred_check
      _
    $region39: #{tpu_custom_call.1} parent=1 // pred_check_branch
      %326 = sbr.rel (0) target = $region41
    $region40: #{tpu_custom_call.1} parent=1 // pred_region
      %s328 = ssub.s32 256, 256
      %329 = vsyncadd [#allocation6], %s328
      %s330 = sshll.u32 [#allocation10], 4
      %s331 = int_to_ptr.vmem [resolvable:$true] %s330
      %336 = dma.vmem_to_hbm [thread:$0]  %s331, 256, %s6, [#allocation6], 128, 128, 8
    $region41: #{tpu_custom_call.1} parent=1 // pred_fallthru
      _
    // Predicated region
    $region42: #{tpu_custom_call.1} parent=1 // pred_check
      _
    $region43: #{tpu_custom_call.1} parent=1 // pred_check_branch
      %338 = sbr.rel (0) target = $region45
    $region44: #{tpu_custom_call.1} parent=1 // pred_region
      %339 = dma.done [#allocation6], 256
    $region45: #{tpu_custom_call.1} parent=1 // pred_fallthru
      _
    %340 = vsyncpa [#allocation5], 1
    %341 = vsyncpa [#allocation8], 1
    %342 = vsyncpa [#allocation6], 1

</llo_original>
